<compile_context>
chip_gen: v7x
topology: tpu7x:2x2x1
jax: 0.10.0
libtpu: 0.0.40
codegen_flags: <defaults>
</compile_context>

<pallas_src>
import functools

import jax
import jax.numpy as jnp
from jax.experimental import pallas as pl
from jax.experimental.pallas import tpu as pltpu


def fusion_kernel(x_ref, w_ref, b_ref, o_ref, acc_ref, *, k_rem):
    """Computes one (TM, TN) output tile; the K-reduction runs over grid axis 2.

    k_rem: None if tk evenly divides D_in, else D_in % tk (Python int, static).
    """
    k = pl.program_id(2)
    nk = pl.num_programs(2)

    @pl.when(k == 0)
    def _init():
        acc_ref[...] = jnp.zeros_like(acc_ref)

    x_tile = x_ref[...]
    w_tile = w_ref[...]
    if k_rem is not None:
        # Ragged contraction edge: zero the out-of-range K slice of BOTH
        # operands so padded (unspecified) reads cannot contaminate the
        # accumulator.  This branch does not exist when K divides evenly.
        tk = x_tile.shape[-1]
        limit = jnp.where(k == nk - 1, k_rem, tk)
        x_tile = jnp.where(
            jax.lax.broadcasted_iota(jnp.int32, x_tile.shape, 1) < limit, x_tile, 0)
        w_tile = jnp.where(
            jax.lax.broadcasted_iota(jnp.int32, w_tile.shape, 0) < limit, w_tile, 0)

    # MXU matmul, f32 accumulation in VMEM scratch.
    acc_ref[...] += jnp.dot(x_tile, w_tile, preferred_element_type=jnp.float32)

    @pl.when(k == nk - 1)
    def _finalize():
        # Bias (f32) added exactly once, ReLU on the VPU, cast to output dtype.
        o_ref[...] = jnp.maximum(acc_ref[...] + b_ref[...], 0.0).astype(o_ref.dtype)


def _round_up(v, m):
    return ((v + m - 1) // m) * m


def multimodal_fusion(x, w, b, *, tm=256, tn=1024, tk=512,
                      compute_dtype=None, vmem_limit_bytes=None):
    """y = ReLU(x @ w + b).

    x: (B, D_in), w: (D_in, D_out), b: (D_out,) -> (B, D_out)

    compute_dtype: MXU operand dtype (e.g. jnp.bfloat16 — native on v5e/v6e/v7x).
        Prefer storing `w` already in that dtype; only the small activation is
        cast here.  Accumulation, bias and ReLU stay in f32.
    """
    B, D_in = x.shape
    D_out = w.shape[1]
    out_dtype = x.dtype

    cdt = jnp.dtype(compute_dtype) if compute_dtype is not None else w.dtype
    if x.dtype != cdt:
        x = x.astype(cdt)  # activation is small; cheap per-call cast
    if w.dtype != cdt:
        # TODO(synk): avoid this path at call sites — a per-call weight cast is a
        # full extra HBM round trip of the D_in x D_out matrix.
        w = w.astype(cdt)

    # Bias always f32 (epilogue precision), 2-D so it broadcasts over batch rows.
    b2d = b.astype(jnp.float32).reshape(1, D_out)

    # ---- Tile selection: fixed MXU-sized tiles; cdiv grid handles ragged edges.
    m_align = 16 if cdt == jnp.bfloat16 else 8   # bf16 packs 16 sublanes / vreg
    tm = max(m_align, (tm // m_align) * m_align)
    tn = max(128, (tn // 128) * 128)
    tk = max(128, (tk // 128) * 128)
    tm = min(tm, _round_up(B, m_align))          # B <= tm: whole x panel resident
    tn = min(tn, _round_up(D_out, 128))          # lane-dense output stores
    if D_in <= tk:
        tk = D_in                                # single K step, no masking needed
    k_rem = None if D_in % tk == 0 else D_in % tk

    grid = (pl.cdiv(B, tm), pl.cdiv(D_out, tn), pl.cdiv(D_in, tk))
    gm, gn, gk = grid

    cost = pl.CostEstimate(
        flops=2 * B * D_in * D_out,
        transcendentals=0,
        bytes_accessed=(
            x.size * x.dtype.itemsize * gn        # x re-streamed once per N block
            + w.size * w.dtype.itemsize * gm      # W re-streamed once per M block
            + b2d.size * 4 * gm
            + B * D_out * jnp.dtype(out_dtype).itemsize
        ),
    )

    return pl.pallas_call(
        functools.partial(fusion_kernel, k_rem=k_rem),
        out_shape=jax.ShapeDtypeStruct((B, D_out), out_dtype),
        grid=grid,
        in_specs=[
            pl.BlockSpec((tm, tk), lambda i, j, k: (i, k)),   # x tile
            pl.BlockSpec((tk, tn), lambda i, j, k: (k, j)),   # W tile
            pl.BlockSpec((1, tn), lambda i, j, k: (0, j)),    # bias tile (f32)
        ],
        out_specs=pl.BlockSpec((tm, tn), lambda i, j, k: (i, j)),
        scratch_shapes=[pltpu.VMEM((tm, tn), jnp.float32)],
        compiler_params=pltpu.CompilerParams(
            dimension_semantics=("parallel", "parallel", "arbitrary"),
            vmem_limit_bytes=vmem_limit_bytes,
        ),
        cost_estimate=cost,
    )(x, w, b2d)


def reference(x, w, b):
    y = jnp.dot(x, w, precision=jax.lax.Precision.HIGHEST) + b[None, :]
    return jnp.maximum(y, 0.0)


if __name__ == "__main__":
    # Module config: modality_dims=[32] -> total_input_dim=32, fusion_dim=128.
    # NOTE: at this toy size the call is one grid step of pure launch overhead;
    # production dispatch should route such shapes to plain XLA dot+bias+relu.
    total_input_dim, fusion_dim, batch = 32, 128, 8

    key = jax.random.PRNGKey(0)
    kx, kw, kb, kx2, kw2, kb2 = jax.random.split(key, 6)

    # Deterministic init mimicking nn.Linear's uniform(-1/sqrt(fan_in), +).
    bound = 1.0 / (total_input_dim ** 0.5)
    w = jax.random.uniform(kw, (total_input_dim, fusion_dim),
                           minval=-bound, maxval=bound, dtype=jnp.float32)
    b = jax.random.uniform(kb, (fusion_dim,),
                           minval=-bound, maxval=bound, dtype=jnp.float32)
    x = jax.random.normal(kx, (batch, total_input_dim), dtype=jnp.float32)

    out = jax.block_until_ready(multimodal_fusion(x, w, b))
    ref = reference(x, w, b)
    assert out.shape == (batch, fusion_dim)
    assert jnp.allclose(out, ref, atol=5e-3, rtol=5e-3), \
        float(jnp.max(jnp.abs(out - ref)))

    # Ragged-shape check: exercises cdiv edge blocks (N) and the K-edge mask.
    B2, D_in2, D_out2 = 24, 700, 200
    bound2 = 1.0 / (D_in2 ** 0.5)
    w2 = jax.random.uniform(kw2, (D_in2, D_out2),
                            minval=-bound2, maxval=bound2, dtype=jnp.float32)
    b2 = jax.random.uniform(kb2, (D_out2,),
                            minval=-bound2, maxval=bound2, dtype=jnp.float32)
    x2 = jax.random.normal(kx2, (B2, D_in2), dtype=jnp.float32)

    out2 = jax.block_until_ready(multimodal_fusion(x2, w2, b2))
    ref2 = reference(x2, w2, b2)
    assert out2.shape == (B2, D_out2)
    assert jnp.allclose(out2, ref2, atol=1e-2, rtol=1e-2), \
        float(jnp.max(jnp.abs(out2 - ref2)))

    print("KERNEL_OK")
</pallas_src>

<mosaic_0001>
module attributes {stable_mosaic.version = 11 : i64} {
  func.func @fusion_kernel(%arg0: i32, %arg1: i32, %arg2: i32, %arg3: memref<8x32xf32, #tpu.memory_space<vmem>>, %arg4: memref<32x128xf32, #tpu.memory_space<vmem>>, %arg5: memref<1x128xf32, #tpu.memory_space<vmem>>, %arg6: memref<8x128xf32, #tpu.memory_space<vmem>>, %arg7: memref<8x128xf32, #tpu.memory_space<vmem>>) attributes {dimension_semantics = [#tpu.dimension_semantics<parallel>, #tpu.dimension_semantics<parallel>, #tpu.dimension_semantics<arbitrary>], iteration_bounds = array<i64: 1, 1, 1>, scalar_prefetch = 0 : i64, scratch_operands = 1 : i64, tpu.core_type = #tpu.core_type<tc>, window_params = [{transform_indices = @transform_0, window_bounds = array<i64: 8, 32>}, {transform_indices = @transform_1, window_bounds = array<i64: 32, 128>}, {transform_indices = @transform_2, window_bounds = array<i64: 1, 128>}, {transform_indices = @transform_3, window_bounds = array<i64: 8, 128>}]} {
    %c0_i32 = arith.constant 0 : i32
    %0 = arith.cmpi eq, %arg2, %c0_i32 : i32
    %1 = arith.extui %0 : i1 to i32
    %c0_i32_0 = arith.constant 0 : i32
    %2 = arith.cmpi ne, %1, %c0_i32_0 : i32
    scf.if %2 {
      %cst_10 = arith.constant 0.000000e+00 : f32
      %12 = vector.broadcast %cst_10 : f32 to vector<8x128xf32>
      %c0_11 = arith.constant 0 : index
      %c0_12 = arith.constant 0 : index
      %13 = vector.load %arg7[%c0_11, %c0_12] : memref<8x128xf32, #tpu.memory_space<vmem>>, vector<8x128xf32>
      tpu.vector_store %arg7[%c0_11, %c0_12], %12 {strides = array<i32>} : memref<8x128xf32, #tpu.memory_space<vmem>>, vector<8x128xf32>,
    } else {
    }
    %c0 = arith.constant 0 : index
    %c0_1 = arith.constant 0 : index
    %3 = vector.load %arg3[%c0, %c0_1] : memref<8x32xf32, #tpu.memory_space<vmem>>, vector<8x32xf32>
    %c0_2 = arith.constant 0 : index
    %c0_3 = arith.constant 0 : index
    %4 = vector.load %arg4[%c0_2, %c0_3] : memref<32x128xf32, #tpu.memory_space<vmem>>, vector<32x128xf32>
    %c0_4 = arith.constant 0 : index
    %c0_5 = arith.constant 0 : index
    %5 = vector.load %arg7[%c0_4, %c0_5] : memref<8x128xf32, #tpu.memory_space<vmem>>, vector<8x128xf32>
    %cst = arith.constant dense<0.000000e+00> : vector<8x128xf32>
    %6 = tpu.matmul %3, %4, %cst {dimension_numbers = #tpu.dot_dimension_numbers<[1], [0], [0], [1], [0, 0, 1, 1], [], []>} : vector<8x32xf32>, vector<32x128xf32>, vector<8x128xf32> -> vector<8x128xf32>
    %7 = arith.addf %5, %6 : vector<8x128xf32>
    %c0_6 = arith.constant 0 : index
    %c0_7 = arith.constant 0 : index
    %8 = vector.load %arg7[%c0_6, %c0_7] : memref<8x128xf32, #tpu.memory_space<vmem>>, vector<8x128xf32>
    tpu.vector_store %arg7[%c0_6, %c0_7], %7 {strides = array<i32>} : memref<8x128xf32, #tpu.memory_space<vmem>>, vector<8x128xf32>,
    %c0_i32_8 = arith.constant 0 : i32
    %9 = arith.cmpi eq, %arg2, %c0_i32_8 : i32
    %10 = arith.extui %9 : i1 to i32
    %c0_i32_9 = arith.constant 0 : i32
    %11 = arith.cmpi ne, %10, %c0_i32_9 : i32
    scf.if %11 {
      %c0_10 = arith.constant 0 : index
      %c0_11 = arith.constant 0 : index
      %12 = vector.load %arg7[%c0_10, %c0_11] : memref<8x128xf32, #tpu.memory_space<vmem>>, vector<8x128xf32>
      %c0_12 = arith.constant 0 : index
      %c0_13 = arith.constant 0 : index
      %13 = vector.load %arg5[%c0_12, %c0_13] : memref<1x128xf32, #tpu.memory_space<vmem>>, vector<1x128xf32>
      %14 = vector.broadcast %13 : vector<1x128xf32> to vector<8x128xf32>
      %15 = arith.addf %12, %14 : vector<8x128xf32>
      %cst_14 = arith.constant 0.000000e+00 : f32
      %16 = vector.broadcast %cst_14 : f32 to vector<8x128xf32>
      %17 = arith.maximumf %15, %16 : vector<8x128xf32>
      %c0_15 = arith.constant 0 : index
      %c0_16 = arith.constant 0 : index
      %18 = vector.load %arg6[%c0_15, %c0_16] : memref<8x128xf32, #tpu.memory_space<vmem>>, vector<8x128xf32>
      tpu.vector_store %arg6[%c0_15, %c0_16], %17 {strides = array<i32>} : memref<8x128xf32, #tpu.memory_space<vmem>>, vector<8x128xf32>,
    } else {
    }
    return
  }
  func.func @transform_0(%arg0: i32, %arg1: i32, %arg2: i32) -> (i32, i32) {
    %c0_i32 = arith.constant 0 : i32
    return %arg0, %arg2 : i32, i32
  }
  func.func @transform_1(%arg0: i32, %arg1: i32, %arg2: i32) -> (i32, i32) {
    %c0_i32 = arith.constant 0 : i32
    return %arg2, %arg1 : i32, i32
  }
  func.func @transform_2(%arg0: i32, %arg1: i32, %arg2: i32) -> (i32, i32) {
    %c0_i32 = arith.constant 0 : i32
    %c0_i32_0 = arith.constant 0 : i32
    return %c0_i32, %arg1 : i32, i32
  }
  func.func @transform_3(%arg0: i32, %arg1: i32, %arg2: i32) -> (i32, i32) {
    %c0_i32 = arith.constant 0 : i32
    return %arg0, %arg1 : i32, i32
  }
}

</mosaic_0001>

<llo_original>
// kernel: tpu_custom_call.1
$region0: #{tpu_custom_call.1}
  #allocation0 [shape = 'u32[]', space=smem, size = 0x4, offset = 0x4, fixed_abs, tag = 'smem constant byte address 0x4 - core index']
  #allocation1 [shape = 'u32[144,128]{1,0:T(1,128)}', space=vmem, size = 0x12000, scoped, tag = 'internal scratch']
  #allocation2 [shape = 'f32[8,128]{1,0:T(8,128)}', space=vmem, size = 0x1000, scoped, tag = 'scratch operand']
  %s0 = inlined_call_operand.hbm [shape: f32[8,32], index: 0, kind: input, shape index: {}]
  %s1 = inlined_call_operand.hbm [shape: f32[32,128], index: 1, kind: input, shape index: {}]
  %s2 = inlined_call_operand.vmem [shape: f32[1,128], index: 2, kind: input, shape index: {}]
  %s3 = inlined_call_operand.hbm [shape: f32[8,128], index: 3, kind: output, shape index: {}]
  %s4 = sld [smem:[#allocation0]]
  $region38: #{tpu_custom_call.1} parent=0
    _
  %s6 = ssub.s32 1, %s4
  %s7 = scalar_select 0, %s6, %s4
  $region1: #{tpu_custom_call.1} parent=0
    #allocation3 [shape = 'u8[4096]{0}', space=vmem, size = 0x1000, scoped, tag = 'input window, operand 0, single buffered']
    #allocation4 [shape = 's32[1]{0}', space=sflag, size = 0x4, scoped, tag = 'scoped memory for tpu_custom_call.1']
    #allocation5 [shape = 's32[1]{0}', space=sflag, size = 0x4, scoped, tag = 'scoped memory for tpu_custom_call.1']
    #allocation6 [shape = 'u8[16384]{0}', space=vmem, size = 0x4000, scoped, tag = 'input window, operand 1, single buffered']
    #allocation7 [shape = 's32[1]{0}', space=sflag, size = 0x4, scoped, tag = 'scoped memory for tpu_custom_call.1']
    #allocation8 [shape = 'u8[4096]{0}', space=vmem, size = 0x1000, scoped, tag = 'output window, operand 0, single buffered']
    %8 = vsyncpa [#allocation4], 0
    %9 = vsyncpa [#allocation7], 0
    %10 = vsyncpa [#allocation5], 0
    // Predicated region
    $region2: #{tpu_custom_call.1} parent=1 // pred_check
      _
    $region3: #{tpu_custom_call.1} parent=1 // pred_check_branch
      %12 = sbr.rel (0) target = $region5
    $region4: #{tpu_custom_call.1} parent=1 // pred_region
      %s14 = ssub.s32 128, 128
      %15 = vsyncadd [#allocation4], %s14
      %s17 = sshll.u32 [#allocation3], 4
      %s18 = int_to_ptr.vmem [resolvable:$true] %s17
      %20 = dma.hbm_to_vmem [thread:$0]  %s0, 128, %s18, [#allocation4]
    $region5: #{tpu_custom_call.1} parent=1 // pred_fallthru
      _
    // Predicated region
    $region6: #{tpu_custom_call.1} parent=1 // pred_check
      _
    $region7: #{tpu_custom_call.1} parent=1 // pred_check_branch
      %22 = sbr.rel (0) target = $region9
    $region8: #{tpu_custom_call.1} parent=1 // pred_region
      %s24 = ssub.s32 512, 512
      %25 = vsyncadd [#allocation7], %s24
      %s26 = sshll.u32 [#allocation6], 4
      %s27 = int_to_ptr.vmem [resolvable:$true] %s26
      %32 = dma.hbm_to_vmem [thread:$0]  %s1, 512, %s27, [#allocation7], 128, 128, 8
    $region9: #{tpu_custom_call.1} parent=1 // pred_fallthru
      _
    // Predicated region
    $region10: #{tpu_custom_call.1} parent=1 // pred_check
      _
    $region11: #{tpu_custom_call.1} parent=1 // pred_check_branch
      %34 = sbr.rel (0) target = $region13
    $region12: #{tpu_custom_call.1} parent=1 // pred_region
      _
    $region13: #{tpu_custom_call.1} parent=1 // pred_fallthru
      _
    // Predicated region
    $region14: #{tpu_custom_call.1} parent=1 // pred_check
      _
    $region15: #{tpu_custom_call.1} parent=1 // pred_check_branch
      %36 = sbr.rel (0) target = $region17
    $region16: #{tpu_custom_call.1} parent=1 // pred_region
      %37 = dma.done [#allocation4], 128
    $region17: #{tpu_custom_call.1} parent=1 // pred_fallthru
      _
    // Predicated region
    $region18: #{tpu_custom_call.1} parent=1 // pred_check
      _
    $region19: #{tpu_custom_call.1} parent=1 // pred_check_branch
      %39 = sbr.rel (0) target = $region21
    $region20: #{tpu_custom_call.1} parent=1 // pred_region
      %40 = dma.done [#allocation7], 512
    $region21: #{tpu_custom_call.1} parent=1 // pred_fallthru
      _
    %p41 = scmp.eq.s32.totalorder 0, 0
    // Predicated region
    $region22: #{tpu_custom_call.1} parent=1 // pred_check
      %p42 = pneg %p41
    $region23: #{tpu_custom_call.1} parent=1 // pred_check_branch
      %44 = sbr.rel (%p42) target = $region25
    $region24: #{tpu_custom_call.1} parent=1 // pred_region
      %45 = vst [vmem:[#allocation2] sm:$0xff] 0.0
    $region25: #{tpu_custom_call.1} parent=1 // pred_fallthru
      _
    %v46 = vld [vmem:[#allocation3] sm:$0xff]
    %v47 = vld [vmem:[#allocation6] sm:$0xff]
    %v48 = vld [vmem:[#allocation6 + $0x8] sm:$0xff]
    %v49 = vld [vmem:[#allocation6 + $0x10] sm:$0xff]
    %v50 = vld [vmem:[#allocation6 + $0x18] sm:$0xff]
    %v51 = vld [vmem:[#allocation2] sm:$0xff]
    %vm52 = vcmask 261120
    %v54 = vsel %vm52, %v46, 0
    %56 = vmatprep.subr.mxu0 0.0
    %57 = vmatpush1.msra.mxu0 %v47
    %58 = vmatprep.subr.mxu0 0.0
    %59 = vmatpush1.msra.mxu0 %v48
    %60 = vmatprep.subr.mxu0 0.0
    %61 = vmatpush1.msra.mxu0 %v49
    %62 = vmatprep.subr.mxu0 0.0
    %63 = vmatpush1.msra.mxu0 %v50
    %64 = vmatprep.subr.mxu0 0.0
    %65 = vmatpush1.msra.mxu0 0.0
    %66 = vmatprep.subr.mxu0 0.0
    %67 = vmatpush1.msra.mxu0 0.0
    %68 = vmatprep.subr.mxu0 0.0
    %69 = vmatpush1.msra.mxu0 0.0
    %70 = vmatprep.subr.mxu0 0.0
    %71 = vmatpush1.msra.mxu0 0.0
    %72 = vmatprep.subr.mxu0 0.0
    %73 = vmatpush1.msra.mxu0 0.0
    %74 = vmatprep.subr.mxu0 0.0
    %75 = vmatpush1.msra.mxu0 0.0
    %76 = vmatprep.subr.mxu0 0.0
    %77 = vmatpush1.msra.mxu0 0.0
    %78 = vmatprep.subr.mxu0 0.0
    %79 = vmatpush1.msra.mxu0 0.0
    %80 = vmatprep.subr.mxu0 0.0
    %81 = vmatpush1.msra.mxu0 0.0
    %82 = vmatprep.subr.mxu0 0.0
    %83 = vmatpush1.msra.mxu0 0.0
    %84 = vmatprep.subr.mxu0 0.0
    %85 = vmatpush1.msra.mxu0 0.0
    %86 = vmatprep.subr.mxu0 0.0
    %87 = vmatpush1.msra.mxu0 0.0
    %88 = vmatprep.subr.mxu0 0.0
    %89 = vmatpush1.msra.mxu0 0.0
    %90 = vmatprep.subr.mxu0 0.0
    %91 = vmatpush1.msra.mxu0 0.0
    %92 = vmatprep.subr.mxu0 0.0
    %93 = vmatpush1.msra.mxu0 0.0
    %94 = vmatprep.subr.mxu0 0.0
    %95 = vmatpush1.msra.mxu0 0.0
    %96 = vmatprep.subr.mxu0 0.0
    %97 = vmatpush1.msra.mxu0 0.0
    %98 = vmatprep.subr.mxu0 0.0
    %99 = vmatpush1.msra.mxu0 0.0
    %100 = vmatprep.subr.mxu0 0.0
    %101 = vmatpush1.msra.mxu0 0.0
    %102 = vmatprep.subr.mxu0 0.0
    %103 = vmatpush1.msra.mxu0 0.0
    %104 = vmatprep.subr.mxu0 0.0
    %105 = vmatpush1.msra.mxu0 0.0
    %106 = vmatprep.subr.mxu0 0.0
    %107 = vmatpush1.msra.mxu0 0.0
    %108 = vmatprep.subr.mxu0 0.0
    %109 = vmatpush1.msra.mxu0 0.0
    %110 = vmatprep.subr.mxu0 0.0
    %111 = vmatpush1.msra.mxu0 0.0
    %112 = vmatprep.subr.mxu0 0.0
    %113 = vmatpush1.msra.mxu0 0.0
    %114 = vmatprep.subr.mxu0 0.0
    %115 = vmatpush1.msra.mxu0 0.0
    %116 = vmatprep.subr.mxu0 0.0
    %117 = vmatpush1.msra.mxu0 0.0
    %118 = vmatprep.subr.mxu0 0.0
    %119 = vmatpush1.msra.mxu0 0.0
    %120 = vmatprep.mubr.f32.mxu0 0.0
    %121 = vmatmul.mubr.f32.gmra.mrb[0].mxu0 %v54
    %v122 = vpop.f32.mrb[0].mxu0
    %v123 = vadd.f32 0.0, %v122
    %v124 = vpop.f32.mrb[0].mxu0
    %125 = vdwg.mxu0
    %v126 = vadd.f32 %v51, %v123
    %127 = vst [vmem:[#allocation2] sm:$0xff] %v126
    // Predicated region
    $region26: #{tpu_custom_call.1} parent=1 // pred_check
      %p128 = pneg %p41
    $region27: #{tpu_custom_call.1} parent=1 // pred_check_branch
      %130 = sbr.rel (%p128) target = $region29
    $region28: #{tpu_custom_call.1} parent=1 // pred_region
      %v131 = vld [vmem:[#allocation2] sm:$0xff]
      %v132 = vld [vmem:[%s2] sm:$0x1]
      %v134 = vlaneseq
      %v135 = vshrl.u32 %v134, 7
      %v136 = vsub.s32 0, %v135
      %v137 = vrot.slane %v132, %v136
      %v139 = vadd.f32 %v131, %v137
      %v140 = vmax.f32 %v139, 0.0
      %141 = vst [vmem:[#allocation8] sm:$0xff] %v140
    $region29: #{tpu_custom_call.1} parent=1 // pred_fallthru
      _
    // Predicated region
    $region30: #{tpu_custom_call.1} parent=1 // pred_check
      _
    $region31: #{tpu_custom_call.1} parent=1 // pred_check_branch
      %143 = sbr.rel (0) target = $region33
    $region32: #{tpu_custom_call.1} parent=1 // pred_region
      %s145 = ssub.s32 128, 128
      %146 = vsyncadd [#allocation5], %s145
      %s148 = sshll.u32 [#allocation8], 4
      %s149 = int_to_ptr.vmem [resolvable:$true] %s148
      %151 = dma.vmem_to_hbm [thread:$0]  %s149, 128, %s3, [#allocation5]
    $region33: #{tpu_custom_call.1} parent=1 // pred_fallthru
      _
    // Predicated region
    $region34: #{tpu_custom_call.1} parent=1 // pred_check
      _
    $region35: #{tpu_custom_call.1} parent=1 // pred_check_branch
      %153 = sbr.rel (0) target = $region37
    $region36: #{tpu_custom_call.1} parent=1 // pred_region
      %154 = dma.done [#allocation5], 128
    $region37: #{tpu_custom_call.1} parent=1 // pred_fallthru
      _
    %155 = vsyncpa [#allocation4], 1
    %156 = vsyncpa [#allocation7], 1
    %157 = vsyncpa [#allocation5], 1

</llo_original>
